<compile_context>
chip_gen: v5e
topology: v5e:2x2
jax: 0.10.0
libtpu: 0.0.40
codegen_flags: <defaults>
</compile_context>

<pallas_src>
import jax
import jax.numpy as jnp
from jax.experimental import pallas as pl
from jax.experimental.pallas import tpu as pltpu

_LANES = 128                     # vreg lane width (fast axis)
_SUBLANES = 8                    # sublane granularity for row blocks
_BLOCK_ROWS = 1024               # default rows per grid step (512 KiB f32)
_SMALL_BYTES = 2 * 1024 * 1024   # <= 2 MiB -> single whole-array call
_BLOCK_BYTES_CAP = 4 * 1024 * 1024  # per-block VMEM cap for the tiled path


def _identity_kernel(x_ref, o_ref):
    # Pure pass-through: copy the resident VMEM tile to the output tile.
    o_ref[...] = x_ref[...]


def _whole_array_copy(x2):
    # Whole array resident in VMEM: no grid, no index_maps, no pipeline.
    return pl.pallas_call(
        _identity_kernel,
        out_shape=jax.ShapeDtypeStruct(x2.shape, x2.dtype),
    )(x2)


def _row_tiled_copy(x2, block_rows):
    rows, cols = x2.shape
    return pl.pallas_call(
        _identity_kernel,
        grid=(pl.cdiv(rows, block_rows),),
        in_specs=[pl.BlockSpec((block_rows, cols), lambda i: (i, 0))],
        out_specs=pl.BlockSpec((block_rows, cols), lambda i: (i, 0)),
        out_shape=jax.ShapeDtypeStruct((rows, cols), x2.dtype),
        compiler_params=pltpu.CompilerParams(
            dimension_semantics=("parallel",)),
    )(x2)


@jax.jit
def none_layer_forward(x):
    """Identity forward of `none_layer`, run through a Pallas TPU kernel."""
    orig_shape = x.shape
    n = x.size
    if n == 0:
        return x

    itemsize = jnp.dtype(x.dtype).itemsize

    # Pick a 2-D view (pure metadata reshape, no data movement, no padding).
    if n % _LANES == 0:
        # Lane-dense slab: every load/store is an unmasked full-lane op.
        x2 = x.reshape(n // _LANES, _LANES)
    elif x.ndim >= 2:
        # Block last dim == full array dim, so (8,128) rule is satisfied
        # without padding (stores may be masked, but only on odd shapes).
        x2 = x.reshape(-1, x.shape[-1])
    else:
        x2 = x.reshape(1, n)

    rows, cols = x2.shape
    total_bytes = n * itemsize

    if total_bytes <= _SMALL_BYTES or rows < 2 * _SUBLANES:
        out2 = _whole_array_copy(x2)
    else:
        # Rows per block: multiple of 8, capped by the per-block VMEM budget.
        max_rows_by_vmem = max(_SUBLANES,
                               _BLOCK_BYTES_CAP // max(1, cols * itemsize))
        block_rows = min(_BLOCK_ROWS, max_rows_by_vmem, rows)
        block_rows = max(_SUBLANES, (block_rows // _SUBLANES) * _SUBLANES)
        # TODO(synk): pathological inputs with a single enormous last dim
        # (8 rows * cols > scoped VMEM) would need column tiling as well.
        out2 = _row_tiled_copy(x2, block_rows)

    # TODO(synk): `self.output` attribute caching is Python-side state with no
    # kernel equivalent; the value is simply returned.
    return out2.reshape(orig_shape)


if __name__ == "__main__":
    key = jax.random.PRNGKey(0)

    # 1) Small path: lane-dense slab, whole-array kernel (no grid).
    x = jax.random.normal(key, (2, 4, 16, 16), jnp.float32)
    out = jax.block_until_ready(none_layer_forward(x))
    assert out.shape == x.shape and out.dtype == x.dtype
    assert jnp.array_equal(out, x)

    # 2) Large path: tiled grid over row blocks (parallel axis), size is a
    #    multiple of 128 so it goes through the lane-dense slab.
    x_big = jax.random.normal(jax.random.PRNGKey(1), (512, 3000), jnp.float32)
    out_big = jax.block_until_ready(none_layer_forward(x_big))
    assert out_big.shape == x_big.shape
    assert jnp.array_equal(out_big, x_big)

    # 3) Odd-size fallback: not a multiple of 128, full-extent last dim block.
    x_odd = jax.random.normal(jax.random.PRNGKey(2), (2, 4, 16, 17), jnp.float32)
    out_odd = jax.block_until_ready(none_layer_forward(x_odd))
    assert out_odd.shape == x_odd.shape
    assert jnp.array_equal(out_odd, x_odd)

    print("KERNEL_OK")
</pallas_src>

<mosaic_0001>
module attributes {stable_mosaic.version = 11 : i64} {
  func.func @_identity_kernel(%arg0: memref<16x128xf32, #tpu.memory_space<vmem>>, %arg1: memref<16x128xf32, #tpu.memory_space<vmem>>) attributes {dimension_semantics = [], scalar_prefetch = 0 : i64, scratch_operands = 0 : i64, tpu.core_type = #tpu.core_type<tc>} {
    %c0 = arith.constant 0 : index
    %c0_0 = arith.constant 0 : index
    %0 = vector.load %arg0[%c0, %c0_0] : memref<16x128xf32, #tpu.memory_space<vmem>>, vector<16x128xf32>
    %c0_1 = arith.constant 0 : index
    %c0_2 = arith.constant 0 : index
    %1 = vector.load %arg1[%c0_1, %c0_2] : memref<16x128xf32, #tpu.memory_space<vmem>>, vector<16x128xf32>
    tpu.vector_store %arg1[%c0_1, %c0_2], %0 {strides = array<i32>} : memref<16x128xf32, #tpu.memory_space<vmem>>, vector<16x128xf32>,
    return
  }
}

</mosaic_0001>

<llo_original>
// kernel: none_layer_forward.1
$region0: #{none_layer_forward.1}
  #allocation0 [shape = 'u32[]', space=smem, size = 0x4, offset = 0x4, fixed_abs, tag = 'smem constant byte address 0x4 - core index']
  #allocation1 [shape = 'u32[72,128]{1,0:T(1,128)}', space=vmem, size = 0x9000, scoped, tag = 'internal scratch']
  %s0 = inlined_call_operand.vmem [shape: f32[16,128], index: 0, kind: input, shape index: {}]
  %s1 = inlined_call_operand.vmem [shape: f32[16,128], index: 1, kind: output, shape index: {}]
  %s2 = sld [smem:[#allocation0]]
  $region14: #{none_layer_forward.1} parent=0
    _
  %s4 = ssub.s32 1, %s2
  %s5 = scalar_select 0, %s4, %s2
  // Predicated region
  $region2: #{none_layer_forward.1} parent=0 // pred_check
    _
  $region3: #{none_layer_forward.1} parent=0 // pred_check_branch
    %7 = sbr.rel (0) target = $region5
  $region4: #{none_layer_forward.1} parent=0 // pred_region
    _
  $region5: #{none_layer_forward.1} parent=0 // pred_fallthru
    _
  %v8 = vld [vmem:[%s0] sm:$0xff]
  %v9 = vld [vmem:[%s0 + $0x8] sm:$0xff]
  %10 = vst [vmem:[%s1] sm:$0xff] %v8
  %11 = vst [vmem:[%s1 + $0x8] sm:$0xff] %v9
  // Predicated region
  $region6: #{none_layer_forward.1} parent=0 // pred_check
    _
  $region7: #{none_layer_forward.1} parent=0 // pred_check_branch
    %13 = sbr.rel (0) target = $region9
  $region8: #{none_layer_forward.1} parent=0 // pred_region
    _
  $region9: #{none_layer_forward.1} parent=0 // pred_fallthru
    _
  // Predicated region
  $region10: #{none_layer_forward.1} parent=0 // pred_check
    _
  $region11: #{none_layer_forward.1} parent=0 // pred_check_branch
    %15 = sbr.rel (0) target = $region13
  $region12: #{none_layer_forward.1} parent=0 // pred_region
    _
  $region13: #{none_layer_forward.1} parent=0 // pred_fallthru
    _

</llo_original>
